<compile_context>
chip_gen: v7x
topology: tpu7x:2x2x1
jax: 0.10.0
libtpu: 0.0.40
codegen_flags: <defaults>
</compile_context>

<pallas_src>
import functools

import jax
import jax.numpy as jnp
from jax.experimental import pallas as pl
from jax.experimental.pallas import tpu as pltpu

_BN_EPS = 1e-5        # nn.BatchNorm1d default eps
_NORM_EPS = 1e-12     # F.normalize default eps


def _layer_kernel(x_ref, wt_ref, invn_ref, g_ref, b_ref, o_ref, *,
                  apply_relu, apply_logexp):
    """One 'linear(normalized W) -> BN(train) -> affine [-> relu | -> log(1e-6+exp)]'
    layer, computed for one tile of output features (columns)."""
    x = x_ref[...]                      # (B, K)  resident across the grid
    wt = wt_ref[...]                    # (K, TN) streamed, pre-transposed weight tile
    inv_b = 1.0 / x.shape[0]

    # MXU matmul, f32 accumulation; F.normalize folded in as a per-column scale.
    h = jnp.dot(x, wt, preferred_element_type=jnp.float32)   # (B, TN)
    h = h * invn_ref[...]

    # BatchNorm1d, training mode (biased batch variance), one-pass stats + rsqrt (EUP).
    s1 = jnp.sum(h, axis=0, keepdims=True)
    s2 = jnp.sum(h * h, axis=0, keepdims=True)
    mu = s1 * inv_b
    var = jnp.maximum(s2 * inv_b - mu * mu, 0.0)
    h = (h - mu) * jax.lax.rsqrt(var + _BN_EPS)

    # Affine (BN1 gamma/beta for layer 1; broadcast scalar gamma/beta for layer 2).
    h = h * g_ref[...] + b_ref[...]

    if apply_relu:
        h = jnp.maximum(h, 0.0)
    if apply_logexp:
        # Matches the module expression exactly (overflows to +inf for h >~ 88, as PyTorch).
        h = jnp.log(1e-6 + jnp.exp(h))

    o_ref[...] = h.astype(o_ref.dtype)


def _pick_tile_n(n_feat, itemsize):
    """Output-feature tile: prefer 256-multiples (v6e/v7x MXU width), bound each weight
    buffer to ~8 MiB so double-buffering fits comfortably on v7x (64 MiB VMEM)."""
    budget = 8 * 1024 * 1024
    for tn in (1024, 512, 256, 128):
        if n_feat % tn == 0 and n_feat * tn * itemsize <= budget:
            return tn
    return n_feat


def _run_layer(x2d, w_t, inv_n, g, b, *, apply_relu, apply_logexp):
    bsz, n_feat = x2d.shape
    tn = _pick_tile_n(n_feat, jnp.dtype(w_t.dtype).itemsize)
    kernel = functools.partial(_layer_kernel,
                               apply_relu=apply_relu, apply_logexp=apply_logexp)
    return pl.pallas_call(
        kernel,
        out_shape=jax.ShapeDtypeStruct((bsz, n_feat), jnp.float32),
        grid=(n_feat // tn,),
        in_specs=[
            pl.BlockSpec((bsz, n_feat), lambda j: (0, 0)),   # x: VMEM-resident, no re-DMA
            pl.BlockSpec((n_feat, tn), lambda j: (0, j)),    # weight tile: streamed
            pl.BlockSpec((1, tn), lambda j: (0, j)),         # inverse row norms
            pl.BlockSpec((1, tn), lambda j: (0, j)),         # affine gamma
            pl.BlockSpec((1, tn), lambda j: (0, j)),         # affine beta
        ],
        out_specs=pl.BlockSpec((bsz, tn), lambda j: (0, j)),
        compiler_params=pltpu.CompilerParams(
            dimension_semantics=("parallel",),               # megacore split on v7x
            vmem_limit_bytes=48 * 1024 * 1024,
        ),
    )(x2d, w_t, inv_n, g, b)


def uncertainty_head(x, fc1, fc2, bn1_gamma, bn1_beta, gamma, beta):
    """x: (B, ...) flattened to (B, F).  fc1/fc2: (F, F) PyTorch (out_feat, in_feat)
    layout, any float dtype (bf16 is streamed as-is).  Returns (B, F) f32 log(sigma^2)."""
    bsz = x.shape[0]
    x2d = x.reshape(bsz, -1).astype(jnp.float32)             # x.view(B, -1)
    n_feat = x2d.shape[1]
    assert fc1.shape == (n_feat, n_feat) and fc2.shape == (n_feat, n_feat)

    def inv_row_norm(w):
        # F.normalize(w): rows / max(||row||, eps)  ==  post-matmul per-column scale.
        ss = jnp.sum(jnp.square(w.astype(jnp.float32)), axis=1)
        return jax.lax.rsqrt(jnp.maximum(ss, _NORM_EPS * _NORM_EPS)).reshape(1, n_feat)

    inv_n1 = inv_row_norm(fc1)
    inv_n2 = inv_row_norm(fc2)

    # Pre-transpose so the kernel contracts ((1,),(0,)) — K lands on RHS sublanes.
    w1_t = fc1.T
    w2_t = fc2.T

    g1 = bn1_gamma.reshape(1, n_feat).astype(jnp.float32)
    b1 = bn1_beta.reshape(1, n_feat).astype(jnp.float32)
    # BN2 is affine=False; the module's scalar gamma/beta are applied as broadcast affine.
    g2 = jnp.broadcast_to(gamma.astype(jnp.float32).reshape(1, 1), (1, n_feat))
    b2 = jnp.broadcast_to(beta.astype(jnp.float32).reshape(1, 1), (1, n_feat))

    h = _run_layer(x2d, w1_t, inv_n1, g1, b1, apply_relu=True, apply_logexp=False)
    out = _run_layer(h, w2_t, inv_n2, g2, b2, apply_relu=False, apply_logexp=True)
    # TODO(synk): BatchNorm running_mean/running_var buffer updates (PyTorch training-mode
    # side effect) are not produced; only the forward output is computed.
    return out


def _reference(x, fc1, fc2, bn1_gamma, bn1_beta, gamma, beta):
    B = x.shape[0]
    x = x.reshape(B, -1).astype(jnp.float32)

    def l2norm(w):
        n = jnp.sqrt(jnp.sum(w * w, axis=1, keepdims=True))
        return w / jnp.maximum(n, _NORM_EPS)

    def bn_train(h):
        mu = jnp.mean(h, axis=0, keepdims=True)
        var = jnp.mean((h - mu) ** 2, axis=0, keepdims=True)
        return (h - mu) / jnp.sqrt(var + _BN_EPS)

    h = x @ l2norm(fc1.astype(jnp.float32)).T
    h = bn_train(h) * bn1_gamma[None, :] + bn1_beta[None, :]
    h = jnp.maximum(h, 0.0)
    h = bn_train(h @ l2norm(fc2.astype(jnp.float32)).T)
    h = gamma * h + beta
    return jnp.log(1e-6 + jnp.exp(h))


if __name__ == "__main__":
    # Small shapes: batch=8, input (8, 2, 8, 8) -> flattened F = 128.
    B, C, H, W = 8, 2, 8, 8
    in_feat = C * H * W                                  # 128

    key = jax.random.PRNGKey(0)
    kx, k1, k2, kg, kb = jax.random.split(key, 5)

    x = jax.random.normal(kx, (B, C, H, W), dtype=jnp.float32)

    # kaiming_normal_ (fan_in mode, a=0): std = sqrt(2 / fan_in)
    std = (2.0 / in_feat) ** 0.5
    fc1 = jax.random.normal(k1, (in_feat, in_feat), dtype=jnp.float32) * std
    fc2 = jax.random.normal(k2, (in_feat, in_feat), dtype=jnp.float32) * std

    # Non-trivial parameter values to exercise every path (module init would be 1/0).
    bn1_gamma = 1.0 + 0.1 * jax.random.normal(kg, (in_feat,), dtype=jnp.float32)
    bn1_beta = 0.1 * jax.random.normal(kb, (in_feat,), dtype=jnp.float32)
    gamma = jnp.array([0.8], jnp.float32)
    beta = jnp.array([0.1], jnp.float32)

    out = uncertainty_head(x, fc1, fc2, bn1_gamma, bn1_beta, gamma, beta)
    out = jax.block_until_ready(out)

    ref = _reference(x, fc1, fc2, bn1_gamma, bn1_beta, gamma, beta)
    assert out.shape == (B, in_feat)
    err = jnp.max(jnp.abs(out - ref))
    assert jnp.allclose(out, ref, atol=2e-4, rtol=2e-4), f"mismatch vs reference, max_abs_err={err}"

    print("KERNEL_OK")
</pallas_src>

<mosaic_0001>
module attributes {stable_mosaic.version = 11 : i64} {
  func.func @_layer_kernel(%arg0: i32, %arg1: memref<8x128xf32, #tpu.memory_space<vmem>>, %arg2: memref<128x128xf32, #tpu.memory_space<vmem>>, %arg3: memref<1x128xf32, #tpu.memory_space<vmem>>, %arg4: memref<1x128xf32, #tpu.memory_space<vmem>>, %arg5: memref<1x128xf32, #tpu.memory_space<vmem>>, %arg6: memref<8x128xf32, #tpu.memory_space<vmem>>) attributes {dimension_semantics = [#tpu.dimension_semantics<parallel>], iteration_bounds = array<i64: 1>, scalar_prefetch = 0 : i64, scratch_operands = 0 : i64, tpu.core_type = #tpu.core_type<tc>, window_params = [{pipeline_mode = #tpu.pipeline_mode<synchronous>, transform_indices = @transform_0, window_bounds = array<i64: 8, 128>}, {transform_indices = @transform_1, window_bounds = array<i64: 128, 128>}, {transform_indices = @transform_2, window_bounds = array<i64: 1, 128>}, {transform_indices = @transform_3, window_bounds = array<i64: 1, 128>}, {transform_indices = @transform_4, window_bounds = array<i64: 1, 128>}, {transform_indices = @transform_5, window_bounds = array<i64: 8, 128>}]} {
    %c0 = arith.constant 0 : index
    %c0_0 = arith.constant 0 : index
    %0 = vector.load %arg1[%c0, %c0_0] : memref<8x128xf32, #tpu.memory_space<vmem>>, vector<8x128xf32>
    %c0_1 = arith.constant 0 : index
    %c0_2 = arith.constant 0 : index
    %1 = vector.load %arg2[%c0_1, %c0_2] : memref<128x128xf32, #tpu.memory_space<vmem>>, vector<128x128xf32>
    %cst = arith.constant dense<0.000000e+00> : vector<8x128xf32>
    %2 = tpu.matmul %0, %1, %cst {dimension_numbers = #tpu.dot_dimension_numbers<[1], [0], [0], [1], [0, 0, 1, 1], [], []>} : vector<8x128xf32>, vector<128x128xf32>, vector<8x128xf32> -> vector<8x128xf32>
    %c0_3 = arith.constant 0 : index
    %c0_4 = arith.constant 0 : index
    %3 = vector.load %arg3[%c0_3, %c0_4] : memref<1x128xf32, #tpu.memory_space<vmem>>, vector<1x128xf32>
    %4 = vector.broadcast %3 : vector<1x128xf32> to vector<8x128xf32>
    %5 = arith.mulf %2, %4 : vector<8x128xf32>
    %cst_5 = arith.constant dense<0.000000e+00> : vector<128xf32>
    %6 = vector.multi_reduction <add>, %5, %cst_5 [0] : vector<8x128xf32> to vector<128xf32>
    %7 = vector.shape_cast %6 : vector<128xf32> to vector<1x128xf32>
    %8 = arith.mulf %5, %5 : vector<8x128xf32>
    %cst_6 = arith.constant dense<0.000000e+00> : vector<128xf32>
    %9 = vector.multi_reduction <add>, %8, %cst_6 [0] : vector<8x128xf32> to vector<128xf32>
    %10 = vector.shape_cast %9 : vector<128xf32> to vector<1x128xf32>
    %cst_7 = arith.constant 1.250000e-01 : f32
    %11 = vector.broadcast %cst_7 : f32 to vector<1x128xf32>
    %12 = arith.mulf %7, %11 : vector<1x128xf32>
    %cst_8 = arith.constant 1.250000e-01 : f32
    %13 = vector.broadcast %cst_8 : f32 to vector<1x128xf32>
    %14 = arith.mulf %10, %13 : vector<1x128xf32>
    %15 = arith.mulf %12, %12 : vector<1x128xf32>
    %16 = arith.subf %14, %15 : vector<1x128xf32>
    %cst_9 = arith.constant 0.000000e+00 : f32
    %17 = vector.broadcast %cst_9 : f32 to vector<1x128xf32>
    %18 = arith.maximumf %16, %17 : vector<1x128xf32>
    %19 = vector.broadcast %12 : vector<1x128xf32> to vector<8x128xf32>
    %20 = arith.subf %5, %19 : vector<8x128xf32>
    %cst_10 = arith.constant 9.99999974E-6 : f32
    %21 = vector.broadcast %cst_10 : f32 to vector<1x128xf32>
    %22 = arith.addf %18, %21 : vector<1x128xf32>
    %23 = math.rsqrt %22 : vector<1x128xf32>
    %24 = vector.broadcast %23 : vector<1x128xf32> to vector<8x128xf32>
    %25 = arith.mulf %20, %24 : vector<8x128xf32>
    %c0_11 = arith.constant 0 : index
    %c0_12 = arith.constant 0 : index
    %26 = vector.load %arg4[%c0_11, %c0_12] : memref<1x128xf32, #tpu.memory_space<vmem>>, vector<1x128xf32>
    %27 = vector.broadcast %26 : vector<1x128xf32> to vector<8x128xf32>
    %28 = arith.mulf %25, %27 : vector<8x128xf32>
    %c0_13 = arith.constant 0 : index
    %c0_14 = arith.constant 0 : index
    %29 = vector.load %arg5[%c0_13, %c0_14] : memref<1x128xf32, #tpu.memory_space<vmem>>, vector<1x128xf32>
    %30 = vector.broadcast %29 : vector<1x128xf32> to vector<8x128xf32>
    %31 = arith.addf %28, %30 : vector<8x128xf32>
    %cst_15 = arith.constant 0.000000e+00 : f32
    %32 = vector.broadcast %cst_15 : f32 to vector<8x128xf32>
    %33 = arith.maximumf %31, %32 : vector<8x128xf32>
    %c0_16 = arith.constant 0 : index
    %c0_17 = arith.constant 0 : index
    %34 = vector.load %arg6[%c0_16, %c0_17] : memref<8x128xf32, #tpu.memory_space<vmem>>, vector<8x128xf32>
    tpu.vector_store %arg6[%c0_16, %c0_17], %33 {strides = array<i32>} : memref<8x128xf32, #tpu.memory_space<vmem>>, vector<8x128xf32>,
    return
  }
  func.func @transform_0(%arg0: i32) -> (i32, i32) {
    %c0_i32 = arith.constant 0 : i32
    %c0_i32_0 = arith.constant 0 : i32
    %c0_i32_1 = arith.constant 0 : i32
    return %c0_i32, %c0_i32_0 : i32, i32
  }
  func.func @transform_1(%arg0: i32) -> (i32, i32) {
    %c0_i32 = arith.constant 0 : i32
    %c0_i32_0 = arith.constant 0 : i32
    return %c0_i32, %arg0 : i32, i32
  }
  func.func @transform_2(%arg0: i32) -> (i32, i32) {
    %c0_i32 = arith.constant 0 : i32
    %c0_i32_0 = arith.constant 0 : i32
    return %c0_i32, %arg0 : i32, i32
  }
  func.func @transform_3(%arg0: i32) -> (i32, i32) {
    %c0_i32 = arith.constant 0 : i32
    %c0_i32_0 = arith.constant 0 : i32
    return %c0_i32, %arg0 : i32, i32
  }
  func.func @transform_4(%arg0: i32) -> (i32, i32) {
    %c0_i32 = arith.constant 0 : i32
    %c0_i32_0 = arith.constant 0 : i32
    return %c0_i32, %arg0 : i32, i32
  }
  func.func @transform_5(%arg0: i32) -> (i32, i32) {
    %c0_i32 = arith.constant 0 : i32
    %c0_i32_0 = arith.constant 0 : i32
    return %c0_i32, %arg0 : i32, i32
  }
}

</mosaic_0001>

<llo_original>
// kernel: tpu_custom_call.1
$region0: #{tpu_custom_call.1}
  #allocation0 [shape = 'u32[]', space=smem, size = 0x4, offset = 0x4, fixed_abs, tag = 'smem constant byte address 0x4 - core index']
  #allocation1 [shape = 'u32[144,128]{1,0:T(1,128)}', space=vmem, size = 0x12000, scoped, tag = 'internal scratch']
  %s0 = inlined_call_operand.hbm [shape: f32[8,128], index: 0, kind: input, shape index: {}]
  %s1 = inlined_call_operand.hbm [shape: f32[128,128], index: 1, kind: input, shape index: {}]
  %s2 = inlined_call_operand.vmem [shape: f32[1,128], index: 2, kind: input, shape index: {}]
  %s3 = inlined_call_operand.vmem [shape: f32[1,128], index: 3, kind: input, shape index: {}]
  %s4 = inlined_call_operand.vmem [shape: f32[1,128], index: 4, kind: input, shape index: {}]
  %s5 = inlined_call_operand.hbm [shape: f32[8,128], index: 5, kind: output, shape index: {}]
  %s6 = sld [smem:[#allocation0]]
  $region38: #{tpu_custom_call.1} parent=0
    _
  %s8 = ssub.s32 1, %s6
  %s9 = scalar_select 0, %s8, %s6
  $region1: #{tpu_custom_call.1} parent=0
    #allocation2 [shape = 'u8[4096]{0}', space=vmem, size = 0x1000, scoped, tag = 'input window, operand 0, single buffered']
    #allocation3 [shape = 's32[1]{0}', space=sflag, size = 0x4, scoped, tag = 'scoped memory for tpu_custom_call.1']
    #allocation4 [shape = 's32[1]{0}', space=sflag, size = 0x4, scoped, tag = 'scoped memory for tpu_custom_call.1']
    #allocation5 [shape = 'u8[65536]{0}', space=vmem, size = 0x10000, scoped, tag = 'input window, operand 1, single buffered']
    #allocation6 [shape = 's32[1]{0}', space=sflag, size = 0x4, scoped, tag = 'scoped memory for tpu_custom_call.1']
    #allocation7 [shape = 'u8[4096]{0}', space=vmem, size = 0x1000, scoped, tag = 'output window, operand 0, single buffered']
    %10 = vsyncpa [#allocation3], 0
    %11 = vsyncpa [#allocation6], 0
    %12 = vsyncpa [#allocation4], 0
    // Predicated region
    $region2: #{tpu_custom_call.1} parent=1 // pred_check
      _
    $region3: #{tpu_custom_call.1} parent=1 // pred_check_branch
      %14 = sbr.rel (0) target = $region5
    $region4: #{tpu_custom_call.1} parent=1 // pred_region
      %s16 = ssub.s32 128, 128
      %17 = vsyncadd [#allocation3], %s16
      %s19 = sshll.u32 [#allocation2], 4
      %s20 = int_to_ptr.vmem [resolvable:$true] %s19
      %22 = dma.hbm_to_vmem [thread:$0]  %s0, 128, %s20, [#allocation3]
    $region5: #{tpu_custom_call.1} parent=1 // pred_fallthru
      _
    // Predicated region
    $region6: #{tpu_custom_call.1} parent=1 // pred_check
      _
    $region7: #{tpu_custom_call.1} parent=1 // pred_check_branch
      %24 = sbr.rel (0) target = $region9
    $region8: #{tpu_custom_call.1} parent=1 // pred_region
      %s26 = ssub.s32 2048, 2048
      %27 = vsyncadd [#allocation6], %s26
      %s28 = sshll.u32 [#allocation5], 4
      %s29 = int_to_ptr.vmem [resolvable:$true] %s28
      %34 = dma.hbm_to_vmem [thread:$0]  %s1, 2048, %s29, [#allocation6], 128, 128, 8
    $region9: #{tpu_custom_call.1} parent=1 // pred_fallthru
      _
    // Predicated region
    $region10: #{tpu_custom_call.1} parent=1 // pred_check
      _
    $region11: #{tpu_custom_call.1} parent=1 // pred_check_branch
      %36 = sbr.rel (0) target = $region13
    $region12: #{tpu_custom_call.1} parent=1 // pred_region
      _
    $region13: #{tpu_custom_call.1} parent=1 // pred_fallthru
      _
    // Predicated region
    $region14: #{tpu_custom_call.1} parent=1 // pred_check
      _
    $region15: #{tpu_custom_call.1} parent=1 // pred_check_branch
      %38 = sbr.rel (0) target = $region17
    $region16: #{tpu_custom_call.1} parent=1 // pred_region
      _
    $region17: #{tpu_custom_call.1} parent=1 // pred_fallthru
      _
    // Predicated region
    $region18: #{tpu_custom_call.1} parent=1 // pred_check
      _
    $region19: #{tpu_custom_call.1} parent=1 // pred_check_branch
      %40 = sbr.rel (0) target = $region21
    $region20: #{tpu_custom_call.1} parent=1 // pred_region
      _
    $region21: #{tpu_custom_call.1} parent=1 // pred_fallthru
      _
    // Predicated region
    $region22: #{tpu_custom_call.1} parent=1 // pred_check
      _
    $region23: #{tpu_custom_call.1} parent=1 // pred_check_branch
      %42 = sbr.rel (0) target = $region25
    $region24: #{tpu_custom_call.1} parent=1 // pred_region
      %43 = dma.done [#allocation3], 128
    $region25: #{tpu_custom_call.1} parent=1 // pred_fallthru
      _
    // Predicated region
    $region26: #{tpu_custom_call.1} parent=1 // pred_check
      _
    $region27: #{tpu_custom_call.1} parent=1 // pred_check_branch
      %45 = sbr.rel (0) target = $region29
    $region28: #{tpu_custom_call.1} parent=1 // pred_region
      %46 = dma.done [#allocation6], 2048
    $region29: #{tpu_custom_call.1} parent=1 // pred_fallthru
      _
    %v47 = vld [vmem:[#allocation2] sm:$0xff]
    %v48 = vld [vmem:[#allocation5] sm:$0xff]
    %v49 = vld [vmem:[#allocation5 + $0x8] sm:$0xff]
    %v50 = vld [vmem:[#allocation5 + $0x10] sm:$0xff]
    %v51 = vld [vmem:[#allocation5 + $0x18] sm:$0xff]
    %v52 = vld [vmem:[#allocation5 + $0x20] sm:$0xff]
    %v53 = vld [vmem:[#allocation5 + $0x28] sm:$0xff]
    %v54 = vld [vmem:[#allocation5 + $0x30] sm:$0xff]
    %v55 = vld [vmem:[#allocation5 + $0x38] sm:$0xff]
    %v56 = vld [vmem:[#allocation5 + $0x40] sm:$0xff]
    %v57 = vld [vmem:[#allocation5 + $0x48] sm:$0xff]
    %v58 = vld [vmem:[#allocation5 + $0x50] sm:$0xff]
    %v59 = vld [vmem:[#allocation5 + $0x58] sm:$0xff]
    %v60 = vld [vmem:[#allocation5 + $0x60] sm:$0xff]
    %v61 = vld [vmem:[#allocation5 + $0x68] sm:$0xff]
    %v62 = vld [vmem:[#allocation5 + $0x70] sm:$0xff]
    %v63 = vld [vmem:[#allocation5 + $0x78] sm:$0xff]
    %64 = vmatprep.subr.mxu0 0.0
    %65 = vmatpush1.msra.mxu0 %v48
    %66 = vmatprep.subr.mxu0 0.0
    %67 = vmatpush1.msra.mxu0 %v49
    %68 = vmatprep.subr.mxu0 0.0
    %69 = vmatpush1.msra.mxu0 %v50
    %70 = vmatprep.subr.mxu0 0.0
    %71 = vmatpush1.msra.mxu0 %v51
    %72 = vmatprep.subr.mxu0 0.0
    %73 = vmatpush1.msra.mxu0 %v52
    %74 = vmatprep.subr.mxu0 0.0
    %75 = vmatpush1.msra.mxu0 %v53
    %76 = vmatprep.subr.mxu0 0.0
    %77 = vmatpush1.msra.mxu0 %v54
    %78 = vmatprep.subr.mxu0 0.0
    %79 = vmatpush1.msra.mxu0 %v55
    %80 = vmatprep.subr.mxu0 0.0
    %81 = vmatpush1.msra.mxu0 %v56
    %82 = vmatprep.subr.mxu0 0.0
    %83 = vmatpush1.msra.mxu0 %v57
    %84 = vmatprep.subr.mxu0 0.0
    %85 = vmatpush1.msra.mxu0 %v58
    %86 = vmatprep.subr.mxu0 0.0
    %87 = vmatpush1.msra.mxu0 %v59
    %88 = vmatprep.subr.mxu0 0.0
    %89 = vmatpush1.msra.mxu0 %v60
    %90 = vmatprep.subr.mxu0 0.0
    %91 = vmatpush1.msra.mxu0 %v61
    %92 = vmatprep.subr.mxu0 0.0
    %93 = vmatpush1.msra.mxu0 %v62
    %94 = vmatprep.subr.mxu0 0.0
    %95 = vmatpush1.msra.mxu0 %v63
    %96 = vmatprep.subr.mxu0 0.0
    %97 = vmatpush1.msra.mxu0 0.0
    %98 = vmatprep.subr.mxu0 0.0
    %99 = vmatpush1.msra.mxu0 0.0
    %100 = vmatprep.subr.mxu0 0.0
    %101 = vmatpush1.msra.mxu0 0.0
    %102 = vmatprep.subr.mxu0 0.0
    %103 = vmatpush1.msra.mxu0 0.0
    %104 = vmatprep.subr.mxu0 0.0
    %105 = vmatpush1.msra.mxu0 0.0
    %106 = vmatprep.subr.mxu0 0.0
    %107 = vmatpush1.msra.mxu0 0.0
    %108 = vmatprep.subr.mxu0 0.0
    %109 = vmatpush1.msra.mxu0 0.0
    %110 = vmatprep.subr.mxu0 0.0
    %111 = vmatpush1.msra.mxu0 0.0
    %112 = vmatprep.subr.mxu0 0.0
    %113 = vmatpush1.msra.mxu0 0.0
    %114 = vmatprep.subr.mxu0 0.0
    %115 = vmatpush1.msra.mxu0 0.0
    %116 = vmatprep.subr.mxu0 0.0
    %117 = vmatpush1.msra.mxu0 0.0
    %118 = vmatprep.subr.mxu0 0.0
    %119 = vmatpush1.msra.mxu0 0.0
    %120 = vmatprep.subr.mxu0 0.0
    %121 = vmatpush1.msra.mxu0 0.0
    %122 = vmatprep.subr.mxu0 0.0
    %123 = vmatpush1.msra.mxu0 0.0
    %124 = vmatprep.subr.mxu0 0.0
    %125 = vmatpush1.msra.mxu0 0.0
    %126 = vmatprep.subr.mxu0 0.0
    %127 = vmatpush1.msra.mxu0 0.0
    %128 = vmatprep.mubr.f32.mxu0 0.0
    %129 = vmatmul.mubr.f32.gmra.mrb[0].mxu0 %v47
    %v130 = vpop.f32.mrb[0].mxu0
    %v131 = vadd.f32 0.0, %v130
    %v132 = vpop.f32.mrb[0].mxu0
    %133 = vdwg.mxu0
    %v134 = vld [vmem:[%s2] sm:$0x1]
    %v136 = vlaneseq
    %v137 = vshrl.u32 %v136, 7
    %v138 = vsub.s32 0, %v137
    %v139 = vrot.slane %v134, %v138
    %v141 = vmul.f32 %v131, %v139
    %v142 = vrot.slane %v141, 4
    %v143 = vadd.f32 %v141, %v142
    %v144 = vrot.slane %v143, 2
    %v145 = vadd.f32 %v143, %v144
    %v146 = vrot.slane %v145, 1
    %v147 = vadd.f32 %v145, %v146
    %v148 = vmul.f32 %v141, %v141
    %v149 = vrot.slane %v148, 4
    %v150 = vadd.f32 %v148, %v149
    %v151 = vrot.slane %v150, 2
    %v152 = vadd.f32 %v150, %v151
    %v153 = vrot.slane %v152, 1
    %v154 = vadd.f32 %v152, %v153
    %v155 = vmul.f32 %v147, 0.125
    %v156 = vmul.f32 %v154, 0.125
    %v157 = vmul.f32 %v155, %v155
    %v158 = vsub.f32 %v156, %v157
    %v159 = vmax.f32 %v158, 0.0
    %v160 = vsub.f32 %v141, %v155
    %v161 = vadd.f32 %v159, 1e-05
    %v162 = vrsqrt.pop %v161
    %v163 = vmul.f32 %v160, %v162
    %v164 = vld [vmem:[%s3] sm:$0x1]
    %v166 = vlaneseq
    %v167 = vshrl.u32 %v166, 7
    %v168 = vsub.s32 0, %v167
    %v169 = vrot.slane %v164, %v168
    %v171 = vmul.f32 %v163, %v169
    %v172 = vld [vmem:[%s4] sm:$0x1]
    %v174 = vlaneseq
    %v175 = vshrl.u32 %v174, 7
    %v176 = vsub.s32 0, %v175
    %v177 = vrot.slane %v172, %v176
    %v179 = vadd.f32 %v171, %v177
    %v180 = vmax.f32 %v179, 0.0
    %181 = vst [vmem:[#allocation7] sm:$0xff] %v180
    // Predicated region
    $region30: #{tpu_custom_call.1} parent=1 // pred_check
      _
    $region31: #{tpu_custom_call.1} parent=1 // pred_check_branch
      %183 = sbr.rel (0) target = $region33
    $region32: #{tpu_custom_call.1} parent=1 // pred_region
      %s185 = ssub.s32 128, 128
      %186 = vsyncadd [#allocation4], %s185
      %s188 = sshll.u32 [#allocation7], 4
      %s189 = int_to_ptr.vmem [resolvable:$true] %s188
      %191 = dma.vmem_to_hbm [thread:$0]  %s189, 128, %s5, [#allocation4]
    $region33: #{tpu_custom_call.1} parent=1 // pred_fallthru
      _
    // Predicated region
    $region34: #{tpu_custom_call.1} parent=1 // pred_check
      _
    $region35: #{tpu_custom_call.1} parent=1 // pred_check_branch
      %193 = sbr.rel (0) target = $region37
    $region36: #{tpu_custom_call.1} parent=1 // pred_region
      %194 = dma.done [#allocation4], 128
    $region37: #{tpu_custom_call.1} parent=1 // pred_fallthru
      _
    %195 = vsyncpa [#allocation3], 1
    %196 = vsyncpa [#allocation6], 1
    %197 = vsyncpa [#allocation4], 1

</llo_original>
